<compile_context>
chip_gen: v5e
topology: v5e:2x2
jax: 0.10.0
libtpu: 0.0.40
codegen_flags: <defaults>
</compile_context>

<pallas_src>
import functools

import jax
import jax.numpy as jnp
from jax.experimental import pallas as pl
from jax.experimental.pallas import tpu as pltpu

EPS = 1e-5
LANE = 128  # lane width / MXU tile alignment target


# ---------------------------------------------------------------------------
# small helpers
# ---------------------------------------------------------------------------
def _round_up(n, m):
    return ((n + m - 1) // m) * m


def _pad_cols(a, new_cols):
    pad = new_cols - a.shape[1]
    return a if pad == 0 else jnp.pad(a, ((0, 0), (0, pad)))


def _pad_rows(a, new_rows):
    pad = new_rows - a.shape[0]
    return a if pad == 0 else jnp.pad(a, ((0, pad), (0, 0)))


def _vmem_budget(working_set_bytes):
    # working set * 2 (double buffering) + headroom; floor at v5e's 16 MiB
    # scoped default, clamp below v7x's 64 MiB physical VMEM.
    return int(min(max(2 * working_set_bytes + (2 << 20), 16 << 20), 60 << 20))


def _bn_scale_shift(mean, var, gamma, beta):
    # BatchNorm1d (training mode, biased variance) in scale/shift form:
    # per-feature rsqrt runs on the EUP over a (1, H) row only; the big-tile
    # work is a single FMA pass.
    scale = gamma * jax.lax.rsqrt(var + EPS)
    shift = beta - mean * scale
    return scale, shift


# ---------------------------------------------------------------------------
# fused single-block kernel (small batch: everything VMEM-resident)
# ---------------------------------------------------------------------------
def _fused_kernel(x_ref,
                  w1_ref, b1_ref, g1_ref, be1_ref,
                  w2_ref, b2_ref, g2_ref, be2_ref,
                  w3_ref, g3_ref, be3_ref,
                  w4_ref, b4_ref,
                  y_ref):
    mm_dtype = w1_ref.dtype  # weights pre-cast (f32 or bf16) in the wrapper

    def mm(a, w_ref):
        return jnp.dot(a.astype(mm_dtype), w_ref[...],
                       preferred_element_type=jnp.float32)

    def bn(h, g_ref, be_ref):
        # NOTE: E[h^2] - E[h]^2 is less stable than the two-pass form; fine in
        # f32 at these activation scales (stats always stay in f32).
        mean = jnp.mean(h, axis=0, keepdims=True)
        var = jnp.maximum(jnp.mean(h * h, axis=0, keepdims=True) - mean * mean, 0.0)
        scale, shift = _bn_scale_shift(mean, var, g_ref[...], be_ref[...])
        return h * scale + shift

    h = jnp.maximum(mm(x_ref[...], w1_ref) + b1_ref[...], 0.0)
    h = bn(h, g1_ref, be1_ref)
    h = jnp.maximum(mm(h, w2_ref) + b2_ref[...], 0.0)
    h = bn(h, g2_ref, be2_ref)
    h = bn(mm(h, w3_ref), g3_ref, be3_ref)   # b3 omitted: cancelled by BN3 mean
    h = jnp.maximum(h, 0.0)
    y_ref[...] = (mm(h, w4_ref) + b4_ref[...]).astype(y_ref.dtype)


# ---------------------------------------------------------------------------
# batch-gridded two-pass-BN kernels (weights VMEM-resident, full-batch stats)
# ---------------------------------------------------------------------------
def _fc_relu_stats_kernel(x_ref, w_ref, b_ref, h_ref, stats_ref):
    """fc1 -> ReLU on one batch tile; accumulate per-feature sum / sumsq."""
    @pl.when(pl.program_id(0) == 0)
    def _():
        stats_ref[...] = jnp.zeros_like(stats_ref)

    h = jnp.maximum(
        jnp.dot(x_ref[...].astype(w_ref.dtype), w_ref[...],
                preferred_element_type=jnp.float32) + b_ref[...], 0.0)
    h_ref[...] = h.astype(h_ref.dtype)
    # Cross-sublane reductions stay on the XLU (hidden under the MXU at scale).
    stats_ref[0:1, :] += jnp.sum(h, axis=0, keepdims=True)
    stats_ref[1:2, :] += jnp.sum(h * h, axis=0, keepdims=True)


def _bn_fc_stats_kernel(h_ref, stats_in_ref, g_ref, be_ref, w_ref, b_ref,
                        out_ref, stats_ref, *, batch, relu_after):
    """Apply BN (full-batch stats from the previous pass) -> fc (-> ReLU);
    accumulate the next BN layer's per-feature sum / sumsq."""
    @pl.when(pl.program_id(0) == 0)
    def _():
        stats_ref[...] = jnp.zeros_like(stats_ref)

    inv_b = 1.0 / float(batch)
    mean = stats_in_ref[0:1, :] * inv_b
    var = jnp.maximum(stats_in_ref[1:2, :] * inv_b - mean * mean, 0.0)
    scale, shift = _bn_scale_shift(mean, var, g_ref[...], be_ref[...])
    h = h_ref[...].astype(jnp.float32) * scale + shift
    # TODO(synk): if the VPU ever becomes the binding unit, fold this BN
    # scale/shift into the next matmul's weights/bias instead of the FMA pass.

    o = jnp.dot(h.astype(w_ref.dtype), w_ref[...],
                preferred_element_type=jnp.float32) + b_ref[...]
    if relu_after:
        o = jnp.maximum(o, 0.0)
    out_ref[...] = o.astype(out_ref.dtype)
    stats_ref[0:1, :] += jnp.sum(o, axis=0, keepdims=True)
    stats_ref[1:2, :] += jnp.sum(o * o, axis=0, keepdims=True)


def _bn_relu_fc_kernel(h_ref, stats_in_ref, g_ref, be_ref, w_ref, b_ref,
                       y_ref, *, batch):
    """BN3 -> ReLU -> fc4 + b4; lane-dense (128-padded) output store."""
    inv_b = 1.0 / float(batch)
    mean = stats_in_ref[0:1, :] * inv_b
    var = jnp.maximum(stats_in_ref[1:2, :] * inv_b - mean * mean, 0.0)
    scale, shift = _bn_scale_shift(mean, var, g_ref[...], be_ref[...])
    h = jnp.maximum(h_ref[...].astype(jnp.float32) * scale + shift, 0.0)
    y_ref[...] = (jnp.dot(h.astype(w_ref.dtype), w_ref[...],
                          preferred_element_type=jnp.float32)
                  + b_ref[...]).astype(y_ref.dtype)


# ---------------------------------------------------------------------------
# wrapper-side parameter prep (padding + weight cast)
# ---------------------------------------------------------------------------
def prepare_params(params, matmul_dtype=jnp.float32, align=LANE):
    """Zero-pad feature dims to `align` (MXU/lane alignment; padded BN gammas
    are 0 so padded lanes stay exactly 0), pre-cast matmul weights to
    `matmul_dtype` (bf16 = native MXU path); biases / BN params stay f32.
    b3 is dropped here: it feeds BN3 directly, so BN3's mean subtraction
    cancels it exactly (b3 remains in `params` for API compatibility)."""
    din, h1 = params["w1"].shape
    h2 = params["w2"].shape[1]
    h3 = params["w3"].shape[1]
    out = params["w4"].shape[1]
    h1p, h2p, h3p, outp = (_round_up(d, align) for d in (h1, h2, h3, out))

    def pad_w(w, rows, cols):
        return _pad_cols(_pad_rows(w, rows), cols).astype(matmul_dtype)

    prep = {
        "w1": pad_w(params["w1"], din, h1p),
        "b1": _pad_cols(params["b1"], h1p),
        "g1": _pad_cols(params["g1"], h1p),
        "be1": _pad_cols(params["be1"], h1p),
        "w2": pad_w(params["w2"], h1p, h2p),
        "b2": _pad_cols(params["b2"], h2p),
        "g2": _pad_cols(params["g2"], h2p),
        "be2": _pad_cols(params["be2"], h2p),
        "w3": pad_w(params["w3"], h2p, h3p),
        "g3": _pad_cols(params["g3"], h3p),
        "be3": _pad_cols(params["be3"], h3p),
        "w4": pad_w(params["w4"], h3p, outp),
        "b4": _pad_cols(params["b4"], outp),
    }
    meta = {"dims": (din, h1p, h2p, h3p, outp), "out_dim": out, "half": out // 2}
    return prep, meta


# ---------------------------------------------------------------------------
# forward wrappers
# ---------------------------------------------------------------------------
def _fused_forward(x, prep, meta):
    B = x.shape[0]
    din, h1p, h2p, h3p, outp = meta["dims"]
    args = (x,
            prep["w1"], prep["b1"], prep["g1"], prep["be1"],
            prep["w2"], prep["b2"], prep["g2"], prep["be2"],
            prep["w3"], prep["g3"], prep["be3"],
            prep["w4"], prep["b4"])

    param_bytes = sum(int(a.size) * a.dtype.itemsize for a in args)
    working_set = param_bytes + 4 * B * (h1p + h2p + h3p + outp)
    cost = pl.CostEstimate(
        flops=2 * B * (din * h1p + h1p * h2p + h2p * h3p + h3p * outp),
        transcendentals=h1p + h2p + h3p,      # one rsqrt row per BN layer
        bytes_accessed=param_bytes + 4 * B * outp,
    )
    vmem = pl.BlockSpec(memory_space=pltpu.VMEM)
    return pl.pallas_call(
        _fused_kernel,
        out_shape=jax.ShapeDtypeStruct((B, outp), jnp.float32),
        in_specs=[vmem] * len(args),
        out_specs=vmem,
        compiler_params=pltpu.CompilerParams(
            vmem_limit_bytes=_vmem_budget(working_set)),
        cost_estimate=cost,
    )(*args)


def _gridded_forward(x, prep, meta, batch_tile):
    B = x.shape[0]
    din, h1p, h2p, h3p, outp = meta["dims"]
    assert batch_tile % 8 == 0, "batch_tile must be a multiple of 8 (sublanes)"
    assert B % batch_tile == 0, (
        "batch must divide evenly into batch tiles: BN needs full-batch "
        "statistics, so the batch must not be zero-padded")
    nbt = B // batch_tile

    act_dtype = jnp.float32
    # TODO(synk): store inter-layer activations in bf16 (with 16-row-aligned
    # batch tiles) to halve inter-pass HBM traffic in the bf16 MXU config.

    def tiled(feat):
        return pl.BlockSpec((batch_tile, feat), lambda i: (i, 0))

    def resident(shape):  # weights / stats / BN params: stay resident in VMEM
        return pl.BlockSpec(shape, lambda i: (0, 0))

    working_set = (sum(int(v.size) * v.dtype.itemsize for v in prep.values())
                   + 4 * batch_tile * (din + h1p + h2p + h3p + outp)
                   + 4 * 2 * (h1p + h2p + h3p))
    vmem_limit = _vmem_budget(working_set)
    # Stats accumulation across batch tiles forces "arbitrary"; the final pass
    # has no cross-tile state so it can shard across v7x's two TensorCores.
    # TODO(synk): for v7x megacore on the stats passes, reduce per-core partial
    # sums via CMEM/VMEM_SHARED + core_barrier instead of serializing.
    arb = pltpu.CompilerParams(dimension_semantics=("arbitrary",),
                               vmem_limit_bytes=vmem_limit)
    par = pltpu.CompilerParams(dimension_semantics=("parallel",),
                               vmem_limit_bytes=vmem_limit)

    # Pass 1: fc1 -> ReLU, accumulate BN1 stats.
    h1, s1 = pl.pallas_call(
        _fc_relu_stats_kernel,
        grid=(nbt,),
        in_specs=[tiled(din), resident(prep["w1"].shape),
                  resident(prep["b1"].shape)],
        out_specs=(tiled(h1p), resident((2, h1p))),
        out_shape=(jax.ShapeDtypeStruct((B, h1p), act_dtype),
                   jax.ShapeDtypeStruct((2, h1p), jnp.float32)),
        compiler_params=arb,
    )(x, prep["w1"], prep["b1"])

    # Pass 2: apply BN1 -> fc2 -> ReLU, accumulate BN2 stats.
    h2, s2 = pl.pallas_call(
        functools.partial(_bn_fc_stats_kernel, batch=B, relu_after=True),
        grid=(nbt,),
        in_specs=[tiled(h1p), resident((2, h1p)),
                  resident(prep["g1"].shape), resident(prep["be1"].shape),
                  resident(prep["w2"].shape), resident(prep["b2"].shape)],
        out_specs=(tiled(h2p), resident((2, h2p))),
        out_shape=(jax.ShapeDtypeStruct((B, h2p), act_dtype),
                   jax.ShapeDtypeStruct((2, h2p), jnp.float32)),
        compiler_params=arb,
    )(h1, s1, prep["g1"], prep["be1"], prep["w2"], prep["b2"])

    # Pass 3: apply BN2 -> fc3 (bias dropped: cancelled by BN3), accumulate
    # BN3 stats on the raw (pre-ReLU) fc3 output.
    b3_zero = jnp.zeros((1, h3p), jnp.float32)
    h3, s3 = pl.pallas_call(
        functools.partial(_bn_fc_stats_kernel, batch=B, relu_after=False),
        grid=(nbt,),
        in_specs=[tiled(h2p), resident((2, h2p)),
                  resident(prep["g2"].shape), resident(prep["be2"].shape),
                  resident(prep["w3"].shape), resident((1, h3p))],
        out_specs=(tiled(h3p), resident((2, h3p))),
        out_shape=(jax.ShapeDtypeStruct((B, h3p), act_dtype),
                   jax.ShapeDtypeStruct((2, h3p), jnp.float32)),
        compiler_params=arb,
    )(h2, s2, prep["g2"], prep["be2"], prep["w3"], b3_zero)

    # Pass 4: apply BN3 -> ReLU -> fc4 + b4 (lane-dense padded output).
    y = pl.pallas_call(
        functools.partial(_bn_relu_fc_kernel, batch=B),
        grid=(nbt,),
        in_specs=[tiled(h3p), resident((2, h3p)),
                  resident(prep["g3"].shape), resident(prep["be3"].shape),
                  resident(prep["w4"].shape), resident(prep["b4"].shape)],
        out_specs=tiled(outp),
        out_shape=jax.ShapeDtypeStruct((B, outp), jnp.float32),
        compiler_params=par,
    )(h3, s3, prep["g3"], prep["be3"], prep["w4"], prep["b4"])
    return y


def ff_mlpg_forward(x, params, *, matmul_dtype=jnp.float32, batch_tile=None,
                    align=LANE):
    """Forward pass of ff_mlpg.

    matmul_dtype: jnp.float32 (bit-accurate vs the PyTorch-semantics reference)
        or jnp.bfloat16 (native MXU fast path; weights pre-cast once in the
        wrapper, f32 accumulation, BN stats / elementwise math stay f32).
    batch_tile: None -> single fused kernel with the whole batch resident in
        VMEM (best for small B).  Otherwise the batch-gridded two-pass-BN
        pipeline: weights VMEM-resident, activation tiles pipelined by
        BlockSpec, BN always uses full-batch statistics.
    """
    x = x.astype(jnp.float32)
    prep, meta = prepare_params(params, matmul_dtype, align)
    if batch_tile is None or batch_tile >= x.shape[0]:
        y = _fused_forward(x, prep, meta)
    else:
        y = _gridded_forward(x, prep, meta, batch_tile)
    half, out_dim = meta["half"], meta["out_dim"]
    return y[:, :half], y[:, half:out_dim]   # free lane-dense slices


# ---------------------------------------------------------------------------
# params / reference
# ---------------------------------------------------------------------------
def init_params(key, input_dim, output_dim, n_hid):
    """Deterministic parameter init (shapes match the PyTorch module)."""
    h1 = n_hid
    h2 = int(1.5 * n_hid)
    h3 = 2 * n_hid

    dims = [(input_dim, h1), (h1, h2), (h2, h3), (h3, output_dim)]
    params = {}
    keys = jax.random.split(key, 8)
    for i, (din, dout) in enumerate(dims, start=1):
        bound = 1.0 / jnp.sqrt(din)
        # nn.Linear stores weight as (dout, din); we keep the transposed
        # (din, dout) layout so the kernels compute x @ W + b directly.
        params[f"w{i}"] = jax.random.uniform(
            keys[2 * (i - 1)], (din, dout), jnp.float32, -bound, bound)
        params[f"b{i}"] = jax.random.uniform(
            keys[2 * (i - 1) + 1], (1, dout), jnp.float32, -bound, bound)

    # BatchNorm affine params: PyTorch default init (gamma=1, beta=0).
    for i, h in zip((1, 2, 3), (h1, h2, h3)):
        params[f"g{i}"] = jnp.ones((1, h), jnp.float32)
        params[f"be{i}"] = jnp.zeros((1, h), jnp.float32)
    return params


def _bn_ref(h, gamma, beta):
    # Faithful PyTorch-style train-mode BN for the reference.
    mean = jnp.mean(h, axis=0, keepdims=True)
    var = jnp.mean((h - mean) ** 2, axis=0, keepdims=True)
    return (h - mean) * jax.lax.rsqrt(var + EPS) * gamma + beta


def ff_mlpg_reference(x, params):
    """Pure-JAX reference of the same forward pass (for correctness check)."""
    h = jnp.maximum(x @ params["w1"] + params["b1"], 0.0)
    h = _bn_ref(h, params["g1"], params["be1"])
    h = jnp.maximum(h @ params["w2"] + params["b2"], 0.0)
    h = _bn_ref(h, params["g2"], params["be2"])
    h = h @ params["w3"] + params["b3"]          # reference keeps b3
    h = _bn_ref(h, params["g3"], params["be3"])
    h = jnp.maximum(h, 0.0)
    y = h @ params["w4"] + params["b4"]
    half = params["w4"].shape[1] // 2
    return y[:, :half], y[:, half:]


if __name__ == "__main__":
    input_dim, output_dim, n_hid = 16, 8, 32
    batch = 32

    key = jax.random.PRNGKey(0)
    kx, kp = jax.random.split(key)
    x = jax.random.normal(kx, (batch, input_dim), jnp.float32)
    params = init_params(kp, input_dim, output_dim, n_hid)

    ref_out, ref_sqb = ff_mlpg_reference(x, params)

    # 1) Fused single-kernel path (whole batch VMEM-resident), f32 MXU.
    out, sqb = ff_mlpg_forward(x, params)
    out = jax.block_until_ready(out)
    sqb = jax.block_until_ready(sqb)
    assert out.shape == ref_out.shape and sqb.shape == ref_sqb.shape
    assert jnp.allclose(out, ref_out, atol=1e-4, rtol=1e-4)
    assert jnp.allclose(sqb, ref_sqb, atol=1e-4, rtol=1e-4)

    # 2) Batch-gridded two-pass-BN pipeline (weights VMEM-resident), f32 MXU.
    out_g, sqb_g = ff_mlpg_forward(x, params, batch_tile=8)
    out_g = jax.block_until_ready(out_g)
    sqb_g = jax.block_until_ready(sqb_g)
    assert jnp.allclose(out_g, ref_out, atol=1e-4, rtol=1e-4)
    assert jnp.allclose(sqb_g, ref_sqb, atol=1e-4, rtol=1e-4)

    # 3) Production bf16-MXU config (weights pre-cast in the wrapper, f32
    #    accumulation / BN stats); loose check against the f32 reference.
    out_b, sqb_b = ff_mlpg_forward(x, params, matmul_dtype=jnp.bfloat16,
                                   batch_tile=8)
    out_b = jax.block_until_ready(out_b)
    sqb_b = jax.block_until_ready(sqb_b)
    assert jnp.allclose(out_b, ref_out, atol=0.3, rtol=0.0)
    assert jnp.allclose(sqb_b, ref_sqb, atol=0.3, rtol=0.0)

    print("KERNEL_OK")
</pallas_src>

<mosaic_0001>
module attributes {stable_mosaic.version = 11 : i64} {
  func.func @_fused_kernel(%arg0: memref<32x16xf32, #tpu.memory_space<vmem>>, %arg1: memref<16x128xf32, #tpu.memory_space<vmem>>, %arg2: memref<1x128xf32, #tpu.memory_space<vmem>>, %arg3: memref<1x128xf32, #tpu.memory_space<vmem>>, %arg4: memref<1x128xf32, #tpu.memory_space<vmem>>, %arg5: memref<128x128xf32, #tpu.memory_space<vmem>>, %arg6: memref<1x128xf32, #tpu.memory_space<vmem>>, %arg7: memref<1x128xf32, #tpu.memory_space<vmem>>, %arg8: memref<1x128xf32, #tpu.memory_space<vmem>>, %arg9: memref<128x128xf32, #tpu.memory_space<vmem>>, %arg10: memref<1x128xf32, #tpu.memory_space<vmem>>, %arg11: memref<1x128xf32, #tpu.memory_space<vmem>>, %arg12: memref<128x128xf32, #tpu.memory_space<vmem>>, %arg13: memref<1x128xf32, #tpu.memory_space<vmem>>, %arg14: memref<32x128xf32, #tpu.memory_space<vmem>>) attributes {dimension_semantics = [], scalar_prefetch = 0 : i64, scratch_operands = 0 : i64, tpu.core_type = #tpu.core_type<tc>} {
    %c0 = arith.constant 0 : index
    %c0_0 = arith.constant 0 : index
    %0 = vector.load %arg0[%c0, %c0_0] : memref<32x16xf32, #tpu.memory_space<vmem>>, vector<32x16xf32>
    %c0_1 = arith.constant 0 : index
    %c0_2 = arith.constant 0 : index
    %1 = vector.load %arg1[%c0_1, %c0_2] : memref<16x128xf32, #tpu.memory_space<vmem>>, vector<16x128xf32>
    %cst = arith.constant dense<0.000000e+00> : vector<32x128xf32>
    %2 = tpu.matmul %0, %1, %cst {dimension_numbers = #tpu.dot_dimension_numbers<[1], [0], [0], [1], [0, 0, 1, 1], [], []>} : vector<32x16xf32>, vector<16x128xf32>, vector<32x128xf32> -> vector<32x128xf32>
    %c0_3 = arith.constant 0 : index
    %c0_4 = arith.constant 0 : index
    %3 = vector.load %arg2[%c0_3, %c0_4] : memref<1x128xf32, #tpu.memory_space<vmem>>, vector<1x128xf32>
    %4 = vector.broadcast %3 : vector<1x128xf32> to vector<32x128xf32>
    %5 = arith.addf %2, %4 : vector<32x128xf32>
    %cst_5 = arith.constant 0.000000e+00 : f32
    %6 = vector.broadcast %cst_5 : f32 to vector<32x128xf32>
    %7 = arith.maximumf %5, %6 : vector<32x128xf32>
    %cst_6 = arith.constant dense<0.000000e+00> : vector<128xf32>
    %8 = vector.multi_reduction <add>, %7, %cst_6 [0] : vector<32x128xf32> to vector<128xf32>
    %9 = vector.shape_cast %8 : vector<128xf32> to vector<1x128xf32>
    %cst_7 = arith.constant 3.200000e+01 : f32
    %10 = vector.broadcast %cst_7 : f32 to vector<1x128xf32>
    %11 = arith.divf %9, %10 : vector<1x128xf32>
    %12 = arith.mulf %7, %7 : vector<32x128xf32>
    %cst_8 = arith.constant dense<0.000000e+00> : vector<128xf32>
    %13 = vector.multi_reduction <add>, %12, %cst_8 [0] : vector<32x128xf32> to vector<128xf32>
    %14 = vector.shape_cast %13 : vector<128xf32> to vector<1x128xf32>
    %cst_9 = arith.constant 3.200000e+01 : f32
    %15 = vector.broadcast %cst_9 : f32 to vector<1x128xf32>
    %16 = arith.divf %14, %15 : vector<1x128xf32>
    %17 = arith.mulf %11, %11 : vector<1x128xf32>
    %18 = arith.subf %16, %17 : vector<1x128xf32>
    %cst_10 = arith.constant 0.000000e+00 : f32
    %19 = vector.broadcast %cst_10 : f32 to vector<1x128xf32>
    %20 = arith.maximumf %18, %19 : vector<1x128xf32>
    %c0_11 = arith.constant 0 : index
    %c0_12 = arith.constant 0 : index
    %21 = vector.load %arg3[%c0_11, %c0_12] : memref<1x128xf32, #tpu.memory_space<vmem>>, vector<1x128xf32>
    %c0_13 = arith.constant 0 : index
    %c0_14 = arith.constant 0 : index
    %22 = vector.load %arg4[%c0_13, %c0_14] : memref<1x128xf32, #tpu.memory_space<vmem>>, vector<1x128xf32>
    %cst_15 = arith.constant 9.99999974E-6 : f32
    %23 = vector.broadcast %cst_15 : f32 to vector<1x128xf32>
    %24 = arith.addf %20, %23 : vector<1x128xf32>
    %25 = math.rsqrt %24 : vector<1x128xf32>
    %26 = arith.mulf %21, %25 : vector<1x128xf32>
    %27 = arith.mulf %11, %26 : vector<1x128xf32>
    %28 = arith.subf %22, %27 : vector<1x128xf32>
    %29 = vector.broadcast %26 : vector<1x128xf32> to vector<32x128xf32>
    %30 = arith.mulf %7, %29 : vector<32x128xf32>
    %31 = vector.broadcast %28 : vector<1x128xf32> to vector<32x128xf32>
    %32 = arith.addf %30, %31 : vector<32x128xf32>
    %c0_16 = arith.constant 0 : index
    %c0_17 = arith.constant 0 : index
    %33 = vector.load %arg5[%c0_16, %c0_17] : memref<128x128xf32, #tpu.memory_space<vmem>>, vector<128x128xf32>
    %cst_18 = arith.constant dense<0.000000e+00> : vector<32x128xf32>
    %34 = tpu.matmul %32, %33, %cst_18 {dimension_numbers = #tpu.dot_dimension_numbers<[1], [0], [0], [1], [0, 0, 1, 1], [], []>} : vector<32x128xf32>, vector<128x128xf32>, vector<32x128xf32> -> vector<32x128xf32>
    %c0_19 = arith.constant 0 : index
    %c0_20 = arith.constant 0 : index
    %35 = vector.load %arg6[%c0_19, %c0_20] : memref<1x128xf32, #tpu.memory_space<vmem>>, vector<1x128xf32>
    %36 = vector.broadcast %35 : vector<1x128xf32> to vector<32x128xf32>
    %37 = arith.addf %34, %36 : vector<32x128xf32>
    %cst_21 = arith.constant 0.000000e+00 : f32
    %38 = vector.broadcast %cst_21 : f32 to vector<32x128xf32>
    %39 = arith.maximumf %37, %38 : vector<32x128xf32>
    %cst_22 = arith.constant dense<0.000000e+00> : vector<128xf32>
    %40 = vector.multi_reduction <add>, %39, %cst_22 [0] : vector<32x128xf32> to vector<128xf32>
    %41 = vector.shape_cast %40 : vector<128xf32> to vector<1x128xf32>
    %cst_23 = arith.constant 3.200000e+01 : f32
    %42 = vector.broadcast %cst_23 : f32 to vector<1x128xf32>
    %43 = arith.divf %41, %42 : vector<1x128xf32>
    %44 = arith.mulf %39, %39 : vector<32x128xf32>
    %cst_24 = arith.constant dense<0.000000e+00> : vector<128xf32>
    %45 = vector.multi_reduction <add>, %44, %cst_24 [0] : vector<32x128xf32> to vector<128xf32>
    %46 = vector.shape_cast %45 : vector<128xf32> to vector<1x128xf32>
    %cst_25 = arith.constant 3.200000e+01 : f32
    %47 = vector.broadcast %cst_25 : f32 to vector<1x128xf32>
    %48 = arith.divf %46, %47 : vector<1x128xf32>
    %49 = arith.mulf %43, %43 : vector<1x128xf32>
    %50 = arith.subf %48, %49 : vector<1x128xf32>
    %cst_26 = arith.constant 0.000000e+00 : f32
    %51 = vector.broadcast %cst_26 : f32 to vector<1x128xf32>
    %52 = arith.maximumf %50, %51 : vector<1x128xf32>
    %c0_27 = arith.constant 0 : index
    %c0_28 = arith.constant 0 : index
    %53 = vector.load %arg7[%c0_27, %c0_28] : memref<1x128xf32, #tpu.memory_space<vmem>>, vector<1x128xf32>
    %c0_29 = arith.constant 0 : index
    %c0_30 = arith.constant 0 : index
    %54 = vector.load %arg8[%c0_29, %c0_30] : memref<1x128xf32, #tpu.memory_space<vmem>>, vector<1x128xf32>
    %cst_31 = arith.constant 9.99999974E-6 : f32
    %55 = vector.broadcast %cst_31 : f32 to vector<1x128xf32>
    %56 = arith.addf %52, %55 : vector<1x128xf32>
    %57 = math.rsqrt %56 : vector<1x128xf32>
    %58 = arith.mulf %53, %57 : vector<1x128xf32>
    %59 = arith.mulf %43, %58 : vector<1x128xf32>
    %60 = arith.subf %54, %59 : vector<1x128xf32>
    %61 = vector.broadcast %58 : vector<1x128xf32> to vector<32x128xf32>
    %62 = arith.mulf %39, %61 : vector<32x128xf32>
    %63 = vector.broadcast %60 : vector<1x128xf32> to vector<32x128xf32>
    %64 = arith.addf %62, %63 : vector<32x128xf32>
    %c0_32 = arith.constant 0 : index
    %c0_33 = arith.constant 0 : index
    %65 = vector.load %arg9[%c0_32, %c0_33] : memref<128x128xf32, #tpu.memory_space<vmem>>, vector<128x128xf32>
    %cst_34 = arith.constant dense<0.000000e+00> : vector<32x128xf32>
    %66 = tpu.matmul %64, %65, %cst_34 {dimension_numbers = #tpu.dot_dimension_numbers<[1], [0], [0], [1], [0, 0, 1, 1], [], []>} : vector<32x128xf32>, vector<128x128xf32>, vector<32x128xf32> -> vector<32x128xf32>
    %cst_35 = arith.constant dense<0.000000e+00> : vector<128xf32>
    %67 = vector.multi_reduction <add>, %66, %cst_35 [0] : vector<32x128xf32> to vector<128xf32>
    %68 = vector.shape_cast %67 : vector<128xf32> to vector<1x128xf32>
    %cst_36 = arith.constant 3.200000e+01 : f32
    %69 = vector.broadcast %cst_36 : f32 to vector<1x128xf32>
    %70 = arith.divf %68, %69 : vector<1x128xf32>
    %71 = arith.mulf %66, %66 : vector<32x128xf32>
    %cst_37 = arith.constant dense<0.000000e+00> : vector<128xf32>
    %72 = vector.multi_reduction <add>, %71, %cst_37 [0] : vector<32x128xf32> to vector<128xf32>
    %73 = vector.shape_cast %72 : vector<128xf32> to vector<1x128xf32>
    %cst_38 = arith.constant 3.200000e+01 : f32
    %74 = vector.broadcast %cst_38 : f32 to vector<1x128xf32>
    %75 = arith.divf %73, %74 : vector<1x128xf32>
    %76 = arith.mulf %70, %70 : vector<1x128xf32>
    %77 = arith.subf %75, %76 : vector<1x128xf32>
    %cst_39 = arith.constant 0.000000e+00 : f32
    %78 = vector.broadcast %cst_39 : f32 to vector<1x128xf32>
    %79 = arith.maximumf %77, %78 : vector<1x128xf32>
    %c0_40 = arith.constant 0 : index
    %c0_41 = arith.constant 0 : index
    %80 = vector.load %arg10[%c0_40, %c0_41] : memref<1x128xf32, #tpu.memory_space<vmem>>, vector<1x128xf32>
    %c0_42 = arith.constant 0 : index
    %c0_43 = arith.constant 0 : index
    %81 = vector.load %arg11[%c0_42, %c0_43] : memref<1x128xf32, #tpu.memory_space<vmem>>, vector<1x128xf32>
    %cst_44 = arith.constant 9.99999974E-6 : f32
    %82 = vector.broadcast %cst_44 : f32 to vector<1x128xf32>
    %83 = arith.addf %79, %82 : vector<1x128xf32>
    %84 = math.rsqrt %83 : vector<1x128xf32>
    %85 = arith.mulf %80, %84 : vector<1x128xf32>
    %86 = arith.mulf %70, %85 : vector<1x128xf32>
    %87 = arith.subf %81, %86 : vector<1x128xf32>
    %88 = vector.broadcast %85 : vector<1x128xf32> to vector<32x128xf32>
    %89 = arith.mulf %66, %88 : vector<32x128xf32>
    %90 = vector.broadcast %87 : vector<1x128xf32> to vector<32x128xf32>
    %91 = arith.addf %89, %90 : vector<32x128xf32>
    %cst_45 = arith.constant 0.000000e+00 : f32
    %92 = vector.broadcast %cst_45 : f32 to vector<32x128xf32>
    %93 = arith.maximumf %91, %92 : vector<32x128xf32>
    %c0_46 = arith.constant 0 : index
    %c0_47 = arith.constant 0 : index
    %94 = vector.load %arg12[%c0_46, %c0_47] : memref<128x128xf32, #tpu.memory_space<vmem>>, vector<128x128xf32>
    %cst_48 = arith.constant dense<0.000000e+00> : vector<32x128xf32>
    %95 = tpu.matmul %93, %94, %cst_48 {dimension_numbers = #tpu.dot_dimension_numbers<[1], [0], [0], [1], [0, 0, 1, 1], [], []>} : vector<32x128xf32>, vector<128x128xf32>, vector<32x128xf32> -> vector<32x128xf32>
    %c0_49 = arith.constant 0 : index
    %c0_50 = arith.constant 0 : index
    %96 = vector.load %arg13[%c0_49, %c0_50] : memref<1x128xf32, #tpu.memory_space<vmem>>, vector<1x128xf32>
    %97 = vector.broadcast %96 : vector<1x128xf32> to vector<32x128xf32>
    %98 = arith.addf %95, %97 : vector<32x128xf32>
    %c0_51 = arith.constant 0 : index
    %c0_52 = arith.constant 0 : index
    %99 = vector.load %arg14[%c0_51, %c0_52] : memref<32x128xf32, #tpu.memory_space<vmem>>, vector<32x128xf32>
    tpu.vector_store %arg14[%c0_51, %c0_52], %98 {strides = array<i32>} : memref<32x128xf32, #tpu.memory_space<vmem>>, vector<32x128xf32>,
    return
  }
}

</mosaic_0001>

<llo_original>
// kernel: tpu_custom_call.1
$region0: #{tpu_custom_call.1}
  #allocation0 [shape = 'u32[]', space=smem, size = 0x4, offset = 0x4, fixed_abs, tag = 'smem constant byte address 0x4 - core index']
  #allocation1 [shape = 'u32[72,128]{1,0:T(1,128)}', space=vmem, size = 0x9000, scoped, tag = 'internal scratch']
  %s0 = inlined_call_operand.vmem [shape: f32[32,16], index: 0, kind: input, shape index: {}]
  %s1 = inlined_call_operand.vmem [shape: f32[16,128], index: 1, kind: input, shape index: {}]
  %s2 = inlined_call_operand.vmem [shape: f32[1,128], index: 2, kind: input, shape index: {}]
  %s3 = inlined_call_operand.vmem [shape: f32[1,128], index: 3, kind: input, shape index: {}]
  %s4 = inlined_call_operand.vmem [shape: f32[1,128], index: 4, kind: input, shape index: {}]
  %s5 = inlined_call_operand.hbm [shape: f32[128,128], index: 5, kind: input, shape index: {}]
  %s6 = inlined_call_operand.vmem [shape: f32[1,128], index: 6, kind: input, shape index: {}]
  %s7 = inlined_call_operand.vmem [shape: f32[1,128], index: 7, kind: input, shape index: {}]
  %s8 = inlined_call_operand.vmem [shape: f32[1,128], index: 8, kind: input, shape index: {}]
  %s9 = inlined_call_operand.hbm [shape: f32[128,128], index: 9, kind: input, shape index: {}]
  %s10 = inlined_call_operand.vmem [shape: f32[1,128], index: 10, kind: input, shape index: {}]
  %s11 = inlined_call_operand.vmem [shape: f32[1,128], index: 11, kind: input, shape index: {}]
  %s12 = inlined_call_operand.hbm [shape: f32[128,128], index: 12, kind: input, shape index: {}]
  %s13 = inlined_call_operand.vmem [shape: f32[1,128], index: 13, kind: input, shape index: {}]
  %s14 = inlined_call_operand.hbm [shape: f32[32,128], index: 14, kind: output, shape index: {}]
  %s15 = sld [smem:[#allocation0]]
  $region78: #{tpu_custom_call.1} parent=0
    _
  %s17 = ssub.s32 1, %s15
  %s18 = scalar_select 0, %s17, %s15
  $region1: #{tpu_custom_call.1} parent=0
    #allocation2 [shape = 'u8[65536]{0}', space=vmem, size = 0x10000, scoped, tag = 'input window, operand 5, single buffered']
    #allocation3 [shape = 's32[1]{0}', space=sflag, size = 0x4, scoped, tag = 'scoped memory for tpu_custom_call.1']
    #allocation4 [shape = 's32[1]{0}', space=sflag, size = 0x4, scoped, tag = 'scoped memory for tpu_custom_call.1']
    #allocation5 [shape = 'u8[65536]{0}', space=vmem, size = 0x10000, scoped, tag = 'input window, operand 9, single buffered']
    #allocation6 [shape = 's32[1]{0}', space=sflag, size = 0x4, scoped, tag = 'scoped memory for tpu_custom_call.1']
    #allocation7 [shape = 'u8[65536]{0}', space=vmem, size = 0x10000, scoped, tag = 'input window, operand 12, single buffered']
    #allocation8 [shape = 'u8[16384]{0}', space=vmem, size = 0x4000, scoped, tag = 'output window, operand 0, single buffered']
    %19 = vsyncpa [#allocation3], 0
    %20 = vsyncpa [#allocation6], 0
    %21 = vsyncpa [#allocation4], 0
    // Predicated region
    $region2: #{tpu_custom_call.1} parent=1 // pred_check
      _
    $region3: #{tpu_custom_call.1} parent=1 // pred_check_branch
      %23 = sbr.rel (0) target = $region5
    $region4: #{tpu_custom_call.1} parent=1 // pred_region
      _
    $region5: #{tpu_custom_call.1} parent=1 // pred_fallthru
      _
    // Predicated region
    $region6: #{tpu_custom_call.1} parent=1 // pred_check
      _
    $region7: #{tpu_custom_call.1} parent=1 // pred_check_branch
      %25 = sbr.rel (0) target = $region9
    $region8: #{tpu_custom_call.1} parent=1 // pred_region
      _
    $region9: #{tpu_custom_call.1} parent=1 // pred_fallthru
      _
    // Predicated region
    $region10: #{tpu_custom_call.1} parent=1 // pred_check
      _
    $region11: #{tpu_custom_call.1} parent=1 // pred_check_branch
      %27 = sbr.rel (0) target = $region13
    $region12: #{tpu_custom_call.1} parent=1 // pred_region
      _
    $region13: #{tpu_custom_call.1} parent=1 // pred_fallthru
      _
    // Predicated region
    $region14: #{tpu_custom_call.1} parent=1 // pred_check
      _
    $region15: #{tpu_custom_call.1} parent=1 // pred_check_branch
      %29 = sbr.rel (0) target = $region17
    $region16: #{tpu_custom_call.1} parent=1 // pred_region
      _
    $region17: #{tpu_custom_call.1} parent=1 // pred_fallthru
      _
    // Predicated region
    $region18: #{tpu_custom_call.1} parent=1 // pred_check
      _
    $region19: #{tpu_custom_call.1} parent=1 // pred_check_branch
      %31 = sbr.rel (0) target = $region21
    $region20: #{tpu_custom_call.1} parent=1 // pred_region
      _
    $region21: #{tpu_custom_call.1} parent=1 // pred_fallthru
      _
    // Predicated region
    $region22: #{tpu_custom_call.1} parent=1 // pred_check
      _
    $region23: #{tpu_custom_call.1} parent=1 // pred_check_branch
      %33 = sbr.rel (0) target = $region25
    $region24: #{tpu_custom_call.1} parent=1 // pred_region
      %35 = vsyncadd [#allocation3], 0
      %s36 = sshll.u32 %s5, 4
      %s37 = int_to_ptr.hbm [resolvable:$true] %s36
      %s38 = sshll.u32 [#allocation2], 4
      %s39 = int_to_ptr.vmem [resolvable:$true] %s38
      %44 = dma.hbm_to_vmem [thread:$0]  %s37, 2048, %s39, [#allocation3], 128, 128, 8
    $region25: #{tpu_custom_call.1} parent=1 // pred_fallthru
      _
    // Predicated region
    $region26: #{tpu_custom_call.1} parent=1 // pred_check
      _
    $region27: #{tpu_custom_call.1} parent=1 // pred_check_branch
      %46 = sbr.rel (0) target = $region29
    $region28: #{tpu_custom_call.1} parent=1 // pred_region
      _
    $region29: #{tpu_custom_call.1} parent=1 // pred_fallthru
      _
    // Predicated region
    $region30: #{tpu_custom_call.1} parent=1 // pred_check
      _
    $region31: #{tpu_custom_call.1} parent=1 // pred_check_branch
      %48 = sbr.rel (0) target = $region33
    $region32: #{tpu_custom_call.1} parent=1 // pred_region
      _
    $region33: #{tpu_custom_call.1} parent=1 // pred_fallthru
      _
    // Predicated region
    $region34: #{tpu_custom_call.1} parent=1 // pred_check
      _
    $region35: #{tpu_custom_call.1} parent=1 // pred_check_branch
      %50 = sbr.rel (0) target = $region37
    $region36: #{tpu_custom_call.1} parent=1 // pred_region
      _
    $region37: #{tpu_custom_call.1} parent=1 // pred_fallthru
      _
    // Predicated region
    $region38: #{tpu_custom_call.1} parent=1 // pred_check
      _
    $region39: #{tpu_custom_call.1} parent=1 // pred_check_branch
      %52 = sbr.rel (0) target = $region41
    $region40: #{tpu_custom_call.1} parent=1 // pred_region
      %54 = vsyncadd [#allocation6], 0
      %s55 = sshll.u32 %s9, 4
      %s56 = int_to_ptr.hbm [resolvable:$true] %s55
      %s57 = sshll.u32 [#allocation5], 4
      %s58 = int_to_ptr.vmem [resolvable:$true] %s57
      %63 = dma.hbm_to_vmem [thread:$0]  %s56, 2048, %s58, [#allocation6], 128, 128, 8
    $region41: #{tpu_custom_call.1} parent=1 // pred_fallthru
      _
    // Predicated region
    $region42: #{tpu_custom_call.1} parent=1 // pred_check
      _
    $region43: #{tpu_custom_call.1} parent=1 // pred_check_branch
      %65 = sbr.rel (0) target = $region45
    $region44: #{tpu_custom_call.1} parent=1 // pred_region
      _
    $region45: #{tpu_custom_call.1} parent=1 // pred_fallthru
      _
    // Predicated region
    $region46: #{tpu_custom_call.1} parent=1 // pred_check
      _
    $region47: #{tpu_custom_call.1} parent=1 // pred_check_branch
      %67 = sbr.rel (0) target = $region49
    $region48: #{tpu_custom_call.1} parent=1 // pred_region
      _
    $region49: #{tpu_custom_call.1} parent=1 // pred_fallthru
      _
    // Predicated region
    $region50: #{tpu_custom_call.1} parent=1 // pred_check
      _
    $region51: #{tpu_custom_call.1} parent=1 // pred_check_branch
      %69 = sbr.rel (0) target = $region53
    $region52: #{tpu_custom_call.1} parent=1 // pred_region
      %71 = vsyncadd [#allocation6], 0
      %s72 = sshll.u32 %s12, 4
      %s73 = int_to_ptr.hbm [resolvable:$true] %s72
      %s74 = sshll.u32 [#allocation7], 4
      %s75 = int_to_ptr.vmem [resolvable:$true] %s74
      %80 = dma.hbm_to_vmem [thread:$0]  %s73, 2048, %s75, [#allocation6], 128, 128, 8
    $region53: #{tpu_custom_call.1} parent=1 // pred_fallthru
      _
    // Predicated region
    $region54: #{tpu_custom_call.1} parent=1 // pred_check
      _
    $region55: #{tpu_custom_call.1} parent=1 // pred_check_branch
      %82 = sbr.rel (0) target = $region57
    $region56: #{tpu_custom_call.1} parent=1 // pred_region
      _
    $region57: #{tpu_custom_call.1} parent=1 // pred_fallthru
      _
    // Predicated region
    $region58: #{tpu_custom_call.1} parent=1 // pred_check
      _
    $region59: #{tpu_custom_call.1} parent=1 // pred_check_branch
      %84 = sbr.rel (0) target = $region61
    $region60: #{tpu_custom_call.1} parent=1 // pred_region
      %86 = dma.done [#allocation3], 2048
    $region61: #{tpu_custom_call.1} parent=1 // pred_fallthru
      _
    // Predicated region
    $region62: #{tpu_custom_call.1} parent=1 // pred_check
      _
    $region63: #{tpu_custom_call.1} parent=1 // pred_check_branch
      %88 = sbr.rel (0) target = $region65
    $region64: #{tpu_custom_call.1} parent=1 // pred_region
      %90 = dma.done [#allocation6], 2048
    $region65: #{tpu_custom_call.1} parent=1 // pred_fallthru
      _
    // Predicated region
    $region66: #{tpu_custom_call.1} parent=1 // pred_check
      _
    $region67: #{tpu_custom_call.1} parent=1 // pred_check_branch
      %92 = sbr.rel (0) target = $region69
    $region68: #{tpu_custom_call.1} parent=1 // pred_region
      %94 = dma.done [#allocation6], 2048
    $region69: #{tpu_custom_call.1} parent=1 // pred_fallthru
      _
    %v95 = vld [vmem:[%s0] sm:$0xff]
    %v96 = vld [vmem:[%s0 + $0x8] sm:$0xff]
    %v97 = vld [vmem:[%s0 + $0x10] sm:$0xff]
    %v98 = vld [vmem:[%s0 + $0x18] sm:$0xff]
    %v99 = vld [vmem:[%s1] sm:$0xff]
    %v100 = vld [vmem:[%s1 + $0x8] sm:$0xff]
    %v101 = vld [vmem:[%s2] sm:$0x1]
    %v103 = vperm.slane %v101, 0
    %vm105 = vcmask 130048
    %v107 = vsel %vm105, %v95, 0
    %v110 = vsel %vm105, %v96, 0
    %v113 = vsel %vm105, %v97, 0
    %v116 = vsel %vm105, %v98, 0
    %118 = vmatpush.msra.mxu0 0.0
    %119 = vmatpush.msra.mxu0 0.0
    %120 = vmatpush.msra.mxu0 0.0
    %121 = vmatpush.msra.mxu0 0.0
    %122 = vmatpush.msra.mxu0 0.0
    %123 = vmatpush.msra.mxu0 0.0
    %124 = vmatpush.msra.mxu0 0.0
    %125 = vmatpush.msra.mxu0 0.0
    %126 = vmatpush.msra.mxu0 0.0
    %127 = vmatpush.msra.mxu0 0.0
    %128 = vmatpush.msra.mxu0 0.0
    %129 = vmatpush.msra.mxu0 0.0
    %130 = vmatpush.msra.mxu0 0.0
    %131 = vmatpush.msra.mxu0 0.0
    %132 = vmatpush.msra.mxu0 %v100
    %133 = vmatpush.msra.mxu0 %v99
    %134 = vmatmul.f32.gmra.mxu0 %v107
    %v135 = vpop.f32.mrf.mxu0
    %v136 = vadd.f32 %v103, %v135
    %137 = vmatmul.f32.gmra.mxu0 %v110
    %v138 = vpop.f32.mrf.mxu0
    %v139 = vadd.f32 %v103, %v138
    %140 = vmatmul.f32.gmra.mxu0 %v113
    %v141 = vpop.f32.mrf.mxu0
    %v142 = vadd.f32 %v103, %v141
    %143 = vmatmul.f32.gmra.mxu0 %v116
    %v144 = vpop.f32.mrf.mxu0
    %v145 = vadd.f32 %v103, %v144
    %146 = vdwg.mxu0
    %v147 = vmax.f32 %v136, 0.0
    %v148 = vmax.f32 %v139, 0.0
    %v149 = vmax.f32 %v142, 0.0
    %v150 = vmax.f32 %v145, 0.0
    %v151 = vadd.f32 %v147, %v148
    %v152 = vadd.f32 %v151, %v149
    %v153 = vadd.f32 %v152, %v150
    %v154 = vrot.slane %v153, 4
    %v155 = vadd.f32 %v153, %v154
    %v156 = vrot.slane %v155, 2
    %v157 = vadd.f32 %v155, %v156
    %v158 = vrot.slane %v157, 1
    %v159 = vadd.f32 %v157, %v158
    %v160 = vrcp.pop 32.0
    %v161 = vmul.f32 32.0, %v160
    %v162 = vsub.f32 1.0, %v161
    %v163 = vmul.f32 %v160, %v162
    %v164 = vadd.f32 %v160, %v163
    %vm165 = vweird.f32 %v160
    %v166 = vsel %vm165, %v160, %v164
    %v167 = vmul.f32 %v159, %v166
    %v168 = vmul.f32 %v147, %v147
    %v169 = vmul.f32 %v148, %v148
    %v170 = vmul.f32 %v149, %v149
    %v171 = vmul.f32 %v150, %v150
    %v172 = vadd.f32 %v168, %v169
    %v173 = vadd.f32 %v172, %v170
    %v174 = vadd.f32 %v173, %v171
    %v175 = vrot.slane %v174, 4
    %v176 = vadd.f32 %v174, %v175
    %v177 = vrot.slane %v176, 2
    %v178 = vadd.f32 %v176, %v177
    %v179 = vrot.slane %v178, 1
    %v180 = vadd.f32 %v178, %v179
    %v181 = vmul.f32 %v180, %v166
    %v182 = vmul.f32 %v167, %v167
    %v183 = vsub.f32 %v181, %v182
    %v184 = vmax.f32 %v183, 0.0
    %v185 = vld [vmem:[%s3] sm:$0x1]
    %v186 = vld [vmem:[%s4] sm:$0x1]
    %v187 = vadd.f32 %v184, 1e-05
    %v188 = vrsqrt.pop %v187
    %v189 = vmul.f32 %v188, %v187
    %v190 = vmul.f32 %v189, %v188
    %v191 = vmul.f32 0.5, %v190
    %v192 = vsub.f32 1.5, %v191
    %v193 = vmul.f32 %v188, %v192
    %vm194 = vweird.f32 %v187
    %vm195 = vweird.f32 %v188
    %vm196 = vmor %vm194, %vm195
    %v197 = vsel %vm196, %v188, %v193
    %v198 = vmul.f32 %v185, %v197
    %v199 = vmul.f32 %v167, %v198
    %v200 = vsub.f32 %v186, %v199
    %v202 = vperm.slane %v198, 0
    %v204 = vmul.f32 %v147, %v202
    %v205 = vmul.f32 %v148, %v202
    %v206 = vmul.f32 %v149, %v202
    %v207 = vmul.f32 %v150, %v202
    %v209 = vperm.slane %v200, 0
    %v211 = vadd.f32 %v204, %v209
    %v212 = vadd.f32 %v205, %v209
    %v213 = vadd.f32 %v206, %v209
    %v214 = vadd.f32 %v207, %v209
    %v215 = vld [vmem:[#allocation2] sm:$0xff]
    %v216 = vld [vmem:[#allocation2 + $0x8] sm:$0xff]
    %v217 = vld [vmem:[#allocation2 + $0x10] sm:$0xff]
    %v218 = vld [vmem:[#allocation2 + $0x18] sm:$0xff]
    %v219 = vld [vmem:[#allocation2 + $0x20] sm:$0xff]
    %v220 = vld [vmem:[#allocation2 + $0x28] sm:$0xff]
    %v221 = vld [vmem:[#allocation2 + $0x30] sm:$0xff]
    %v222 = vld [vmem:[#allocation2 + $0x38] sm:$0xff]
    %v223 = vld [vmem:[#allocation2 + $0x40] sm:$0xff]
    %v224 = vld [vmem:[#allocation2 + $0x48] sm:$0xff]
    %v225 = vld [vmem:[#allocation2 + $0x50] sm:$0xff]
    %v226 = vld [vmem:[#allocation2 + $0x58] sm:$0xff]
    %v227 = vld [vmem:[#allocation2 + $0x60] sm:$0xff]
    %v228 = vld [vmem:[#allocation2 + $0x68] sm:$0xff]
    %v229 = vld [vmem:[#allocation2 + $0x70] sm:$0xff]
    %v230 = vld [vmem:[#allocation2 + $0x78] sm:$0xff]
    %v231 = vld [vmem:[%s6] sm:$0x1]
    %v233 = vperm.slane %v231, 0
    %235 = vmatpush.msra.mxu0 %v230
    %236 = vmatpush.msra.mxu0 %v229
    %237 = vmatpush.msra.mxu0 %v228
    %238 = vmatpush.msra.mxu0 %v227
    %239 = vmatpush.msra.mxu0 %v226
    %240 = vmatpush.msra.mxu0 %v225
    %241 = vmatpush.msra.mxu0 %v224
    %242 = vmatpush.msra.mxu0 %v223
    %243 = vmatpush.msra.mxu0 %v222
    %244 = vmatpush.msra.mxu0 %v221
    %245 = vmatpush.msra.mxu0 %v220
    %246 = vmatpush.msra.mxu0 %v219
    %247 = vmatpush.msra.mxu0 %v218
    %248 = vmatpush.msra.mxu0 %v217
    %249 = vmatpush.msra.mxu0 %v216
    %250 = vmatpush.msra.mxu0 %v215
    %251 = vmatmul.f32.gmra.mxu0 %v211
    %v252 = vpop.f32.mrf.mxu0
    %v253 = vadd.f32 %v233, %v252
    %254 = vmatmul.f32.gmra.mxu0 %v212
    %v255 = vpop.f32.mrf.mxu0
    %v256 = vadd.f32 %v233, %v255
    %257 = vmatmul.f32.gmra.mxu0 %v213
    %v258 = vpop.f32.mrf.mxu0
    %v259 = vadd.f32 %v233, %v258
    %260 = vmatmul.f32.gmra.mxu0 %v214
    %v261 = vpop.f32.mrf.mxu0
    %v262 = vadd.f32 %v233, %v261
    %263 = vdwg.mxu0
    %v264 = vmax.f32 %v253, 0.0
    %v265 = vmax.f32 %v256, 0.0
    %v266 = vmax.f32 %v259, 0.0
    %v267 = vmax.f32 %v262, 0.0
    %v268 = vadd.f32 %v264, %v265
    %v269 = vadd.f32 %v268, %v266
    %v270 = vadd.f32 %v269, %v267
    %v271 = vrot.slane %v270, 4
    %v272 = vadd.f32 %v270, %v271
    %v273 = vrot.slane %v272, 2
    %v274 = vadd.f32 %v272, %v273
    %v275 = vrot.slane %v274, 1
    %v276 = vadd.f32 %v274, %v275
    %v277 = vmul.f32 %v276, %v166
    %v278 = vmul.f32 %v264, %v264
    %v279 = vmul.f32 %v265, %v265
    %v280 = vmul.f32 %v266, %v266
    %v281 = vmul.f32 %v267, %v267
    %v282 = vadd.f32 %v278, %v279
    %v283 = vadd.f32 %v282, %v280
    %v284 = vadd.f32 %v283, %v281
    %v285 = vrot.slane %v284, 4
    %v286 = vadd.f32 %v284, %v285
    %v287 = vrot.slane %v286, 2
    %v288 = vadd.f32 %v286, %v287
    %v289 = vrot.slane %v288, 1
    %v290 = vadd.f32 %v288, %v289
    %v291 = vmul.f32 %v290, %v166
    %v292 = vmul.f32 %v277, %v277
    %v293 = vsub.f32 %v291, %v292
    %v294 = vmax.f32 %v293, 0.0
    %v295 = vld [vmem:[%s7] sm:$0x1]
    %v296 = vld [vmem:[%s8] sm:$0x1]
    %v297 = vadd.f32 %v294, 1e-05
    %v298 = vrsqrt.pop %v297
    %v299 = vmul.f32 %v298, %v297
    %v300 = vmul.f32 %v299, %v298
    %v301 = vmul.f32 0.5, %v300
    %v302 = vsub.f32 1.5, %v301
    %v303 = vmul.f32 %v298, %v302
    %vm304 = vweird.f32 %v297
    %vm305 = vweird.f32 %v298
    %vm306 = vmor %vm304, %vm305
    %v307 = vsel %vm306, %v298, %v303
    %v308 = vmul.f32 %v295, %v307
    %v309 = vmul.f32 %v277, %v308
    %v310 = vsub.f32 %v296, %v309
    %v312 = vperm.slane %v308, 0
    %v314 = vmul.f32 %v264, %v312
    %v315 = vmul.f32 %v265, %v312
    %v316 = vmul.f32 %v266, %v312
    %v317 = vmul.f32 %v267, %v312
    %v319 = vperm.slane %v310, 0
    %v321 = vadd.f32 %v314, %v319
    %v322 = vadd.f32 %v315, %v319
    %v323 = vadd.f32 %v316, %v319
    %v324 = vadd.f32 %v317, %v319
    %v325 = vld [vmem:[#allocation5] sm:$0xff]
    %v326 = vld [vmem:[#allocation5 + $0x8] sm:$0xff]
    %v327 = vld [vmem:[#allocation5 + $0x10] sm:$0xff]
    %v328 = vld [vmem:[#allocation5 + $0x18] sm:$0xff]
    %v329 = vld [vmem:[#allocation5 + $0x20] sm:$0xff]
    %v330 = vld [vmem:[#allocation5 + $0x28] sm:$0xff]
    %v331 = vld [vmem:[#allocation5 + $0x30] sm:$0xff]
    %v332 = vld [vmem:[#allocation5 + $0x38] sm:$0xff]
    %v333 = vld [vmem:[#allocation5 + $0x40] sm:$0xff]
    %v334 = vld [vmem:[#allocation5 + $0x48] sm:$0xff]
    %v335 = vld [vmem:[#allocation5 + $0x50] sm:$0xff]
    %v336 = vld [vmem:[#allocation5 + $0x58] sm:$0xff]
    %v337 = vld [vmem:[#allocation5 + $0x60] sm:$0xff]
    %v338 = vld [vmem:[#allocation5 + $0x68] sm:$0xff]
    %v339 = vld [vmem:[#allocation5 + $0x70] sm:$0xff]
    %v340 = vld [vmem:[#allocation5 + $0x78] sm:$0xff]
    %341 = vmatpush.msra.mxu0 %v340
    %342 = vmatpush.msra.mxu0 %v339
    %343 = vmatpush.msra.mxu0 %v338
    %344 = vmatpush.msra.mxu0 %v337
    %345 = vmatpush.msra.mxu0 %v336
    %346 = vmatpush.msra.mxu0 %v335
    %347 = vmatpush.msra.mxu0 %v334
    %348 = vmatpush.msra.mxu0 %v333
    %349 = vmatpush.msra.mxu0 %v332
    %350 = vmatpush.msra.mxu0 %v331
    %351 = vmatpush.msra.mxu0 %v330
    %352 = vmatpush.msra.mxu0 %v329
    %353 = vmatpush.msra.mxu0 %v328
    %354 = vmatpush.msra.mxu0 %v327
    %355 = vmatpush.msra.mxu0 %v326
    %356 = vmatpush.msra.mxu0 %v325
    %357 = vmatmul.f32.gmra.mxu0 %v321
    %v358 = vpop.f32.mrf.mxu0
    %v359 = vadd.f32 0.0, %v358
    %360 = vmatmul.f32.gmra.mxu0 %v322
    %v361 = vpop.f32.mrf.mxu0
    %v362 = vadd.f32 0.0, %v361
    %363 = vmatmul.f32.gmra.mxu0 %v323
    %v364 = vpop.f32.mrf.mxu0
    %v365 = vadd.f32 0.0, %v364
    %366 = vmatmul.f32.gmra.mxu0 %v324
    %v367 = vpop.f32.mrf.mxu0
    %v368 = vadd.f32 0.0, %v367
    %369 = vdwg.mxu0
    %v370 = vadd.f32 %v359, %v362
    %v371 = vadd.f32 %v370, %v365
    %v372 = vadd.f32 %v371, %v368
    %v373 = vrot.slane %v372, 4
    %v374 = vadd.f32 %v372, %v373
    %v375 = vrot.slane %v374, 2
    %v376 = vadd.f32 %v374, %v375
    %v377 = vrot.slane %v376, 1
    %v378 = vadd.f32 %v376, %v377
    %v379 = vmul.f32 %v378, %v166
    %v380 = vmul.f32 %v359, %v359
    %v381 = vmul.f32 %v362, %v362
    %v382 = vmul.f32 %v365, %v365
    %v383 = vmul.f32 %v368, %v368
    %v384 = vadd.f32 %v380, %v381
    %v385 = vadd.f32 %v384, %v382
    %v386 = vadd.f32 %v385, %v383
    %v387 = vrot.slane %v386, 4
    %v388 = vadd.f32 %v386, %v387
    %v389 = vrot.slane %v388, 2
    %v390 = vadd.f32 %v388, %v389
    %v391 = vrot.slane %v390, 1
    %v392 = vadd.f32 %v390, %v391
    %v393 = vmul.f32 %v392, %v166
    %v394 = vmul.f32 %v379, %v379
    %v395 = vsub.f32 %v393, %v394
    %v396 = vmax.f32 %v395, 0.0
    %v397 = vld [vmem:[%s10] sm:$0x1]
    %v398 = vld [vmem:[%s11] sm:$0x1]
    %v399 = vadd.f32 %v396, 1e-05
    %v400 = vrsqrt.pop %v399
    %v401 = vmul.f32 %v400, %v399
    %v402 = vmul.f32 %v401, %v400
    %v403 = vmul.f32 0.5, %v402
    %v404 = vsub.f32 1.5, %v403
    %v405 = vmul.f32 %v400, %v404
    %vm406 = vweird.f32 %v399
    %vm407 = vweird.f32 %v400
    %vm408 = vmor %vm406, %vm407
    %v409 = vsel %vm408, %v400, %v405
    %v410 = vmul.f32 %v397, %v409
    %v411 = vmul.f32 %v379, %v410
    %v412 = vsub.f32 %v398, %v411
    %v414 = vperm.slane %v410, 0
    %v416 = vmul.f32 %v359, %v414
    %v417 = vmul.f32 %v362, %v414
    %v418 = vmul.f32 %v365, %v414
    %v419 = vmul.f32 %v368, %v414
    %v421 = vperm.slane %v412, 0
    %v423 = vadd.f32 %v416, %v421
    %v424 = vadd.f32 %v417, %v421
    %v425 = vadd.f32 %v418, %v421
    %v426 = vadd.f32 %v419, %v421
    %v427 = vmax.f32 %v423, 0.0
    %v428 = vmax.f32 %v424, 0.0
    %v429 = vmax.f32 %v425, 0.0
    %v430 = vmax.f32 %v426, 0.0
    %v431 = vld [vmem:[#allocation7] sm:$0xff]
    %v432 = vld [vmem:[#allocation7 + $0x8] sm:$0xff]
    %v433 = vld [vmem:[#allocation7 + $0x10] sm:$0xff]
    %v434 = vld [vmem:[#allocation7 + $0x18] sm:$0xff]
    %v435 = vld [vmem:[#allocation7 + $0x20] sm:$0xff]
    %v436 = vld [vmem:[#allocation7 + $0x28] sm:$0xff]
    %v437 = vld [vmem:[#allocation7 + $0x30] sm:$0xff]
    %v438 = vld [vmem:[#allocation7 + $0x38] sm:$0xff]
    %v439 = vld [vmem:[#allocation7 + $0x40] sm:$0xff]
    %v440 = vld [vmem:[#allocation7 + $0x48] sm:$0xff]
    %v441 = vld [vmem:[#allocation7 + $0x50] sm:$0xff]
    %v442 = vld [vmem:[#allocation7 + $0x58] sm:$0xff]
    %v443 = vld [vmem:[#allocation7 + $0x60] sm:$0xff]
    %v444 = vld [vmem:[#allocation7 + $0x68] sm:$0xff]
    %v445 = vld [vmem:[#allocation7 + $0x70] sm:$0xff]
    %v446 = vld [vmem:[#allocation7 + $0x78] sm:$0xff]
    %v447 = vld [vmem:[%s13] sm:$0x1]
    %v449 = vperm.slane %v447, 0
    %451 = vmatpush.msra.mxu0 %v446
    %452 = vmatpush.msra.mxu0 %v445
    %453 = vmatpush.msra.mxu0 %v444
    %454 = vmatpush.msra.mxu0 %v443
    %455 = vmatpush.msra.mxu0 %v442
    %456 = vmatpush.msra.mxu0 %v441
    %457 = vmatpush.msra.mxu0 %v440
    %458 = vmatpush.msra.mxu0 %v439
    %459 = vmatpush.msra.mxu0 %v438
    %460 = vmatpush.msra.mxu0 %v437
    %461 = vmatpush.msra.mxu0 %v436
    %462 = vmatpush.msra.mxu0 %v435
    %463 = vmatpush.msra.mxu0 %v434
    %464 = vmatpush.msra.mxu0 %v433
    %465 = vmatpush.msra.mxu0 %v432
    %466 = vmatpush.msra.mxu0 %v431
    %467 = vmatmul.f32.gmra.mxu0 %v427
    %v468 = vpop.f32.mrf.mxu0
    %v469 = vadd.f32 %v449, %v468
    %470 = vmatmul.f32.gmra.mxu0 %v428
    %v471 = vpop.f32.mrf.mxu0
    %v472 = vadd.f32 %v449, %v471
    %473 = vmatmul.f32.gmra.mxu0 %v429
    %v474 = vpop.f32.mrf.mxu0
    %v475 = vadd.f32 %v449, %v474
    %476 = vmatmul.f32.gmra.mxu0 %v430
    %v477 = vpop.f32.mrf.mxu0
    %v478 = vadd.f32 %v449, %v477
    %479 = vdwg.mxu0
    %480 = vst [vmem:[#allocation8] sm:$0xff] %v469
    %481 = vst [vmem:[#allocation8 + $0x8] sm:$0xff] %v472
    %482 = vst [vmem:[#allocation8 + $0x10] sm:$0xff] %v475
    %483 = vst [vmem:[#allocation8 + $0x18] sm:$0xff] %v478
    // Predicated region
    $region70: #{tpu_custom_call.1} parent=1 // pred_check
      _
    $region71: #{tpu_custom_call.1} parent=1 // pred_check_branch
      %485 = sbr.rel (0) target = $region73
    $region72: #{tpu_custom_call.1} parent=1 // pred_region
      %487 = vsyncadd [#allocation4], 0
      %s488 = sshll.u32 [#allocation8], 4
      %s489 = int_to_ptr.vmem [resolvable:$true] %s488
      %s490 = sshll.u32 %s14, 4
      %s491 = int_to_ptr.hbm [resolvable:$true] %s490
      %496 = dma.vmem_to_hbm [thread:$0]  %s489, 512, %s491, [#allocation4], 128, 128, 8
    $region73: #{tpu_custom_call.1} parent=1 // pred_fallthru
      _
    // Predicated region
    $region74: #{tpu_custom_call.1} parent=1 // pred_check
      _
    $region75: #{tpu_custom_call.1} parent=1 // pred_check_branch
      %498 = sbr.rel (0) target = $region77
    $region76: #{tpu_custom_call.1} parent=1 // pred_region
      %500 = dma.done [#allocation4], 512
    $region77: #{tpu_custom_call.1} parent=1 // pred_fallthru
      _
    %501 = vsyncpa [#allocation3], 1
    %502 = vsyncpa [#allocation6], 1
    %503 = vsyncpa [#allocation4], 1

</llo_original>
